<compile_context>
chip_gen: v7x
topology: tpu7x:2x2x1
jax: 0.10.0
libtpu: 0.0.40
codegen_flags: <defaults>
</compile_context>

<pallas_src>
import functools

import jax
import jax.numpy as jnp
from jax.experimental import pallas as pl
from jax.experimental.pallas import tpu as pltpu


def _round_up(x: int, m: int) -> int:
    return ((x + m - 1) // m) * m


def _mlp_kernel(zin_ref, w1_ref, b1_ref, w23_ref, b23_ref, out_ref):
    # z_network[0] + ReLU: h = relu(zin @ w1 + b1), f32 accumulation.
    h = jnp.dot(zin_ref[...], w1_ref[...], preferred_element_type=jnp.float32)
    h = jnp.maximum(h + b1_ref[...], 0.0).astype(w23_ref.dtype)        # [TILE_B, H]
    # Folded (z_network[2] ∘ predictor[0]): one K=H MXU contraction, N=1.
    logit = jnp.dot(h, w23_ref[...], preferred_element_type=jnp.float32) + b23_ref[...]
    out_ref[...] = jax.nn.sigmoid(logit)                                # [TILE_B, 1] f32


def fold_params(params, compute_dtype=jnp.bfloat16):
    """One-time weight preprocessing, hoisted out of the forward path.

    Folds predictor[0] into z_network[2] (in f32, before the bf16 cast) and
    stores the embedding tables in the matmul compute dtype so the gather
    reads half the bytes.
    """
    f32 = jnp.float32
    w2 = params["w2"].astype(f32)
    w3 = params["w3"].astype(f32)
    return {
        "user_emb": params["user_emb"].astype(compute_dtype),
        "item_emb": params["item_emb"].astype(compute_dtype),
        "w1": params["w1"].astype(compute_dtype),                      # [2E, H]
        "b1": params["b1"].astype(f32).reshape(1, -1),                 # [1, H]
        "w23": (w2 @ w3).astype(compute_dtype),                        # [H, 1]
        "b23": (params["b2"].astype(f32) @ w3
                + params["b3"].astype(f32)).reshape(1, 1),             # [1, 1]
    }


def causal_rec_forward(folded, users, items, do_intervention=False, *, tile_b=None):
    """Equivalent of CausalRecModel.forward. users/items: int32 [B] -> float32 [B]."""
    del do_intervention  # .detach() only affects gradients; forward values identical.

    user_emb, item_emb = folded["user_emb"], folded["item_emb"]
    w1, b1, w23, b23 = folded["w1"], folded["b1"], folded["w23"], folded["b23"]

    two_e, hidden = w1.shape
    batch = users.shape[0]
    cdt = w1.dtype

    if tile_b is None:
        # Large tiles amortize the ~0.35us per-grid-step cost; cap near B/2 so
        # v7x's two TensorCores both get grid steps once B is big enough.
        tile_b = max(256, min(2048, _round_up(pl.cdiv(batch, 2), 256)))
    n_tiles = pl.cdiv(batch, tile_b)
    b_pad = n_tiles * tile_b

    users_p = jnp.pad(users, (0, b_pad - batch))  # padded rows gather row 0,
    items_p = jnp.pad(items, (0, b_pad - batch))  # sliced off before return.

    # Fused gather + concat + cast: under jit this is a single producer writing
    # the bf16 [Bp, 2E] activation slab once (no f32 intermediate HBM pass).
    zin = jnp.concatenate(
        [jnp.take(user_emb, users_p, axis=0),
         jnp.take(item_emb, items_p, axis=0)], axis=1).astype(cdt)      # [Bp, 2E]

    def resident(shape):  # weights stay VMEM-resident across the batch grid
        return pl.BlockSpec(shape, lambda i: (0,) * len(shape))

    out = pl.pallas_call(
        _mlp_kernel,
        out_shape=jax.ShapeDtypeStruct((b_pad, 1), jnp.float32),
        grid=(n_tiles,),
        in_specs=[
            pl.BlockSpec((tile_b, two_e), lambda i: (i, 0)),   # zin tile (streamed)
            resident((two_e, hidden)),                         # w1
            resident((1, hidden)),                             # b1 (f32)
            resident((hidden, 1)),                             # w23 = w2 @ w3
            resident((1, 1)),                                  # b23 (f32)
        ],
        out_specs=pl.BlockSpec((tile_b, 1), lambda i: (i, 0)),
        compiler_params=pltpu.CompilerParams(
            dimension_semantics=("parallel",)),
    )(zin, w1, b1, w23, b23)

    return jnp.squeeze(out.reshape(-1)[:batch])  # matches y_pred.squeeze()


def init_params(key, num_users, num_items, embedding_dim=64, hidden_dim=128):
    ks = jax.random.split(key, 8)
    scale = 0.05
    return {
        "user_emb": jax.random.normal(ks[0], (num_users, embedding_dim), jnp.float32),
        "item_emb": jax.random.normal(ks[1], (num_items, embedding_dim), jnp.float32),
        # z_network.0: Linear(2E -> H)   (stored as x @ W, i.e. torch weight^T)
        "w1": scale * jax.random.normal(ks[2], (2 * embedding_dim, hidden_dim), jnp.float32),
        "b1": scale * jax.random.normal(ks[3], (1, hidden_dim), jnp.float32),
        # z_network.2: Linear(H -> E)
        "w2": scale * jax.random.normal(ks[4], (hidden_dim, embedding_dim), jnp.float32),
        "b2": scale * jax.random.normal(ks[5], (1, embedding_dim), jnp.float32),
        # predictor.0: Linear(E -> 1)
        "w3": scale * jax.random.normal(ks[6], (embedding_dim, 1), jnp.float32),
        "b3": scale * jax.random.normal(ks[7], (1, 1), jnp.float32),
    }


if __name__ == "__main__":
    key = jax.random.PRNGKey(0)
    num_users, num_items = 16, 32
    embedding_dim, hidden_dim = 64, 128

    pkey, ukey, _ = jax.random.split(key, 3)
    params = init_params(pkey, num_users, num_items, embedding_dim, hidden_dim)
    folded = fold_params(params)  # one-time weight fold / bf16 cast

    def reference(users, items):
        # Pure-JAX f32 reference (unfolded network).
        u = jnp.take(params["user_emb"], users, axis=0)
        i = jnp.take(params["item_emb"], items, axis=0)
        zin = jnp.concatenate([u, i], axis=1)
        h = jnp.maximum(zin @ params["w1"] + params["b1"], 0.0)
        z = h @ params["w2"] + params["b2"]
        return jax.nn.sigmoid(z @ params["w3"] + params["b3"]).squeeze()

    # (batch, forced tile_b): single-tile path, and multi-tile + ragged-tail path.
    for batch, tile_b in [(8, None), (600, 256)]:
        uk, ik = jax.random.split(jax.random.fold_in(ukey, batch))
        users = jax.random.randint(uk, (batch,), 0, num_users, dtype=jnp.int32)
        items = jax.random.randint(ik, (batch,), 0, num_items, dtype=jnp.int32)

        fwd = jax.jit(functools.partial(causal_rec_forward, folded, tile_b=tile_b))
        y_pred = jax.block_until_ready(fwd(users, items))
        ref = reference(users, items)

        assert y_pred.shape == (batch,)
        # bf16 tables + bf16 matmul inputs vs f32 reference -> loose absolute tol.
        assert jnp.allclose(y_pred, ref, atol=2e-2, rtol=0.0), (batch, tile_b)

    print("KERNEL_OK")
</pallas_src>

<mosaic_0001>
module attributes {stable_mosaic.version = 11 : i64} {
  func.func @_mlp_kernel(%arg0: i32, %arg1: memref<256x128xbf16, #tpu.memory_space<vmem>>, %arg2: memref<128x128xbf16, #tpu.memory_space<vmem>>, %arg3: memref<1x128xf32, #tpu.memory_space<vmem>>, %arg4: memref<128x1xbf16, #tpu.memory_space<vmem>>, %arg5: memref<1x1xf32, #tpu.memory_space<vmem>>, %arg6: memref<256x1xf32, #tpu.memory_space<vmem>>) attributes {dimension_semantics = [#tpu.dimension_semantics<parallel>], iteration_bounds = array<i64: 1>, scalar_prefetch = 0 : i64, scratch_operands = 0 : i64, tpu.core_type = #tpu.core_type<tc>, window_params = [{transform_indices = @transform_0, window_bounds = array<i64: 256, 128>}, {pipeline_mode = #tpu.pipeline_mode<synchronous>, transform_indices = @transform_1, window_bounds = array<i64: 128, 128>}, {pipeline_mode = #tpu.pipeline_mode<synchronous>, transform_indices = @transform_2, window_bounds = array<i64: 1, 128>}, {pipeline_mode = #tpu.pipeline_mode<synchronous>, transform_indices = @transform_3, window_bounds = array<i64: 128, 1>}, {pipeline_mode = #tpu.pipeline_mode<synchronous>, transform_indices = @transform_4, window_bounds = array<i64: 1, 1>}, {transform_indices = @transform_5, window_bounds = array<i64: 256, 1>}]} {
    %c0 = arith.constant 0 : index
    %c0_0 = arith.constant 0 : index
    %0 = vector.load %arg1[%c0, %c0_0] : memref<256x128xbf16, #tpu.memory_space<vmem>>, vector<256x128xbf16>
    %c0_1 = arith.constant 0 : index
    %c0_2 = arith.constant 0 : index
    %1 = vector.load %arg2[%c0_1, %c0_2] : memref<128x128xbf16, #tpu.memory_space<vmem>>, vector<128x128xbf16>
    %cst = arith.constant dense<0.000000e+00> : vector<256x128xf32>
    %2 = tpu.matmul %0, %1, %cst {dimension_numbers = #tpu.dot_dimension_numbers<[1], [0], [0], [1], [0, 0, 1, 1], [], []>} : vector<256x128xbf16>, vector<128x128xbf16>, vector<256x128xf32> -> vector<256x128xf32>
    %c0_3 = arith.constant 0 : index
    %c0_4 = arith.constant 0 : index
    %3 = vector.load %arg3[%c0_3, %c0_4] : memref<1x128xf32, #tpu.memory_space<vmem>>, vector<1x128xf32>
    %4 = vector.broadcast %3 : vector<1x128xf32> to vector<256x128xf32>
    %5 = arith.addf %2, %4 : vector<256x128xf32>
    %cst_5 = arith.constant 0.000000e+00 : f32
    %6 = vector.broadcast %cst_5 : f32 to vector<256x128xf32>
    %7 = arith.maximumf %5, %6 : vector<256x128xf32>
    %8 = arith.truncf %7 : vector<256x128xf32> to vector<256x128xbf16>
    %c0_6 = arith.constant 0 : index
    %c0_7 = arith.constant 0 : index
    %9 = vector.load %arg4[%c0_6, %c0_7] : memref<128x1xbf16, #tpu.memory_space<vmem>>, vector<128x1xbf16>
    %cst_8 = arith.constant dense<0.000000e+00> : vector<256x1xf32>
    %10 = tpu.matmul %8, %9, %cst_8 {dimension_numbers = #tpu.dot_dimension_numbers<[1], [0], [0], [1], [0, 0, 1, 1], [], []>} : vector<256x128xbf16>, vector<128x1xbf16>, vector<256x1xf32> -> vector<256x1xf32>
    %c0_9 = arith.constant 0 : index
    %c0_10 = arith.constant 0 : index
    %11 = vector.load %arg5[%c0_9, %c0_10] : memref<1x1xf32, #tpu.memory_space<vmem>>, vector<1x1xf32>
    %12 = vector.broadcast %11 : vector<1x1xf32> to vector<256x1xf32>
    %13 = arith.addf %10, %12 : vector<256x1xf32>
    %14 = arith.negf %13 : vector<256x1xf32>
    %15 = math.exp %14 : vector<256x1xf32>
    %cst_11 = arith.constant 1.000000e+00 : f32
    %16 = vector.broadcast %cst_11 : f32 to vector<256x1xf32>
    %17 = arith.addf %16, %15 : vector<256x1xf32>
    %18 = arith.divf %16, %17 : vector<256x1xf32>
    %c0_12 = arith.constant 0 : index
    %c0_13 = arith.constant 0 : index
    %19 = vector.load %arg6[%c0_12, %c0_13] : memref<256x1xf32, #tpu.memory_space<vmem>>, vector<256x1xf32>
    tpu.vector_store %arg6[%c0_12, %c0_13], %18 {strides = array<i32>} : memref<256x1xf32, #tpu.memory_space<vmem>>, vector<256x1xf32>,
    return
  }
  func.func @transform_0(%arg0: i32) -> (i32, i32) {
    %c0_i32 = arith.constant 0 : i32
    %c0_i32_0 = arith.constant 0 : i32
    return %arg0, %c0_i32 : i32, i32
  }
  func.func @transform_1(%arg0: i32) -> (i32, i32) {
    %c0_i32 = arith.constant 0 : i32
    %c0_i32_0 = arith.constant 0 : i32
    %c0_i32_1 = arith.constant 0 : i32
    return %c0_i32, %c0_i32_0 : i32, i32
  }
  func.func @transform_2(%arg0: i32) -> (i32, i32) {
    %c0_i32 = arith.constant 0 : i32
    %c0_i32_0 = arith.constant 0 : i32
    %c0_i32_1 = arith.constant 0 : i32
    return %c0_i32, %c0_i32_0 : i32, i32
  }
  func.func @transform_3(%arg0: i32) -> (i32, i32) {
    %c0_i32 = arith.constant 0 : i32
    %c0_i32_0 = arith.constant 0 : i32
    %c0_i32_1 = arith.constant 0 : i32
    return %c0_i32, %c0_i32_0 : i32, i32
  }
  func.func @transform_4(%arg0: i32) -> (i32, i32) {
    %c0_i32 = arith.constant 0 : i32
    %c0_i32_0 = arith.constant 0 : i32
    %c0_i32_1 = arith.constant 0 : i32
    return %c0_i32, %c0_i32_0 : i32, i32
  }
  func.func @transform_5(%arg0: i32) -> (i32, i32) {
    %c0_i32 = arith.constant 0 : i32
    %c0_i32_0 = arith.constant 0 : i32
    return %arg0, %c0_i32 : i32, i32
  }
}

</mosaic_0001>

<llo_original>
// kernel: causal_rec_forward.1
$region0: #{causal_rec_forward.1}
  #allocation0 [shape = 'u32[]', space=smem, size = 0x4, offset = 0x4, fixed_abs, tag = 'smem constant byte address 0x4 - core index']
  #allocation1 [shape = 'u32[144,128]{1,0:T(1,128)}', space=vmem, size = 0x12000, scoped, tag = 'internal scratch']
  #allocation2 [shape = 'f32[1,1]{1,0:T(1,128)S(1)}', space=vmem, size = 0x200, scoped, tag = 'scoped memory for causal_rec_forward.1']
  %s0 = inlined_call_operand.vmem [shape: bf16[256,128], index: 0, kind: input, shape index: {}]
  %s1 = inlined_call_operand.vmem [shape: bf16[128,128], index: 1, kind: input, shape index: {}]
  %s2 = inlined_call_operand.vmem [shape: f32[1,128], index: 2, kind: input, shape index: {}]
  %s3 = inlined_call_operand.vmem [shape: bf16[128,1], index: 3, kind: input, shape index: {}]
  %s4 = inlined_call_operand.<no memory space> [shape: f32[1,1], index: 4, kind: input, shape index: {}]
  %s5 = inlined_call_operand.vmem [shape: f32[256,1], index: 5, kind: output, shape index: {}]
  %s6 = sld [smem:[#allocation0]]
  $region30: #{causal_rec_forward.1} parent=0
    _
  %s8 = ssub.s32 1, %s6
  %s9 = scalar_select 0, %s8, %s6
  %v10 = vstv %s4
  %11 = vst [vmem:[#allocation2] sm:$0x1] %v10
  // Predicated region
  $region2: #{causal_rec_forward.1} parent=0 // pred_check
    _
  $region3: #{causal_rec_forward.1} parent=0 // pred_check_branch
    %13 = sbr.rel (0) target = $region5
  $region4: #{causal_rec_forward.1} parent=0 // pred_region
    _
  $region5: #{causal_rec_forward.1} parent=0 // pred_fallthru
    _
  // Predicated region
  $region6: #{causal_rec_forward.1} parent=0 // pred_check
    _
  $region7: #{causal_rec_forward.1} parent=0 // pred_check_branch
    %15 = sbr.rel (0) target = $region9
  $region8: #{causal_rec_forward.1} parent=0 // pred_region
    _
  $region9: #{causal_rec_forward.1} parent=0 // pred_fallthru
    _
  // Predicated region
  $region10: #{causal_rec_forward.1} parent=0 // pred_check
    _
  $region11: #{causal_rec_forward.1} parent=0 // pred_check_branch
    %17 = sbr.rel (0) target = $region13
  $region12: #{causal_rec_forward.1} parent=0 // pred_region
    _
  $region13: #{causal_rec_forward.1} parent=0 // pred_fallthru
    _
  // Predicated region
  $region14: #{causal_rec_forward.1} parent=0 // pred_check
    _
  $region15: #{causal_rec_forward.1} parent=0 // pred_check_branch
    %19 = sbr.rel (0) target = $region17
  $region16: #{causal_rec_forward.1} parent=0 // pred_region
    _
  $region17: #{causal_rec_forward.1} parent=0 // pred_fallthru
    _
  // Predicated region
  $region18: #{causal_rec_forward.1} parent=0 // pred_check
    _
  $region19: #{causal_rec_forward.1} parent=0 // pred_check_branch
    %21 = sbr.rel (0) target = $region21
  $region20: #{causal_rec_forward.1} parent=0 // pred_region
    _
  $region21: #{causal_rec_forward.1} parent=0 // pred_fallthru
    _
  %v23 = vld [vmem:[%s0] sm:$0xf]
  %v24 = vld [vmem:[%s0 + $0x4] sm:$0xf]
  %v25 = vld [vmem:[%s0 + $0x8] sm:$0xf]
  %v26 = vld [vmem:[%s0 + $0xc] sm:$0xf]
  %v27 = vld [vmem:[%s0 + $0x10] sm:$0xf]
  %v28 = vld [vmem:[%s0 + $0x14] sm:$0xf]
  %v29 = vld [vmem:[%s0 + $0x18] sm:$0xf]
  %v30 = vld [vmem:[%s0 + $0x1c] sm:$0xf]
  %v31 = vld [vmem:[%s0 + $0x20] sm:$0xf]
  %v32 = vld [vmem:[%s0 + $0x24] sm:$0xf]
  %v33 = vld [vmem:[%s0 + $0x28] sm:$0xf]
  %v34 = vld [vmem:[%s0 + $0x2c] sm:$0xf]
  %v35 = vld [vmem:[%s0 + $0x30] sm:$0xf]
  %v36 = vld [vmem:[%s0 + $0x34] sm:$0xf]
  %v37 = vld [vmem:[%s0 + $0x38] sm:$0xf]
  %v38 = vld [vmem:[%s0 + $0x3c] sm:$0xf]
  %v39 = vld [vmem:[%s0 + $0x40] sm:$0xf]
  %v40 = vld [vmem:[%s0 + $0x44] sm:$0xf]
  %v41 = vld [vmem:[%s0 + $0x48] sm:$0xf]
  %v42 = vld [vmem:[%s0 + $0x4c] sm:$0xf]
  %v43 = vld [vmem:[%s0 + $0x50] sm:$0xf]
  %v44 = vld [vmem:[%s0 + $0x54] sm:$0xf]
  %v45 = vld [vmem:[%s0 + $0x58] sm:$0xf]
  %v46 = vld [vmem:[%s0 + $0x5c] sm:$0xf]
  %v47 = vld [vmem:[%s0 + $0x60] sm:$0xf]
  %v48 = vld [vmem:[%s0 + $0x64] sm:$0xf]
  %v49 = vld [vmem:[%s0 + $0x68] sm:$0xf]
  %v50 = vld [vmem:[%s0 + $0x6c] sm:$0xf]
  %v51 = vld [vmem:[%s0 + $0x70] sm:$0xf]
  %v52 = vld [vmem:[%s0 + $0x74] sm:$0xf]
  %v53 = vld [vmem:[%s0 + $0x78] sm:$0xf]
  %v54 = vld [vmem:[%s0 + $0x7c] sm:$0xf]
  %v55 = vld [vmem:[%s1] sm:$0xf]
  %v56 = vld [vmem:[%s1 + $0x4] sm:$0xf]
  %v57 = vld [vmem:[%s1 + $0x8] sm:$0xf]
  %v58 = vld [vmem:[%s1 + $0xc] sm:$0xf]
  %v59 = vld [vmem:[%s1 + $0x10] sm:$0xf]
  %v60 = vld [vmem:[%s1 + $0x14] sm:$0xf]
  %v61 = vld [vmem:[%s1 + $0x18] sm:$0xf]
  %v62 = vld [vmem:[%s1 + $0x1c] sm:$0xf]
  %v63 = vld [vmem:[%s1 + $0x20] sm:$0xf]
  %v64 = vld [vmem:[%s1 + $0x24] sm:$0xf]
  %v65 = vld [vmem:[%s1 + $0x28] sm:$0xf]
  %v66 = vld [vmem:[%s1 + $0x2c] sm:$0xf]
  %v67 = vld [vmem:[%s1 + $0x30] sm:$0xf]
  %v68 = vld [vmem:[%s1 + $0x34] sm:$0xf]
  %v69 = vld [vmem:[%s1 + $0x38] sm:$0xf]
  %v70 = vld [vmem:[%s1 + $0x3c] sm:$0xf]
  %v71 = vld [vmem:[%s2] sm:$0x1]
  %v73 = vlaneseq
  %v74 = vshrl.u32 %v73, 7
  %v75 = vsub.s32 0, %v74
  %v76 = vrot.slane %v71, %v75
  %v110 = vunpack.c.l.b16 %v23
  %v111 = vunpack.c.l.b16 %v24
  %v112 = vunpack.c.l.b16 %v25
  %v113 = vunpack.c.l.b16 %v26
  %v114 = vunpack.c.l.b16 %v27
  %v115 = vunpack.c.l.b16 %v28
  %v116 = vunpack.c.l.b16 %v29
  %v117 = vunpack.c.l.b16 %v30
  %v118 = vunpack.c.l.b16 %v31
  %v119 = vunpack.c.l.b16 %v32
  %v120 = vunpack.c.l.b16 %v33
  %v121 = vunpack.c.l.b16 %v34
  %v122 = vunpack.c.l.b16 %v35
  %v123 = vunpack.c.l.b16 %v36
  %v124 = vunpack.c.l.b16 %v37
  %v125 = vunpack.c.l.b16 %v38
  %v126 = vunpack.c.l.b16 %v39
  %v127 = vunpack.c.l.b16 %v40
  %v128 = vunpack.c.l.b16 %v41
  %v129 = vunpack.c.l.b16 %v42
  %v130 = vunpack.c.l.b16 %v43
  %v131 = vunpack.c.l.b16 %v44
  %v132 = vunpack.c.l.b16 %v45
  %v133 = vunpack.c.l.b16 %v46
  %v134 = vunpack.c.l.b16 %v47
  %v135 = vunpack.c.l.b16 %v48
  %v136 = vunpack.c.l.b16 %v49
  %v137 = vunpack.c.l.b16 %v50
  %v138 = vunpack.c.l.b16 %v51
  %v139 = vunpack.c.l.b16 %v52
  %v140 = vunpack.c.l.b16 %v53
  %v141 = vunpack.c.l.b16 %v54
  %v142 = vpack.c.b16 %v111, %v110
  %v143 = vpack.c.b16 %v113, %v112
  %v144 = vpack.c.b16 %v115, %v114
  %v145 = vpack.c.b16 %v117, %v116
  %v146 = vpack.c.b16 %v119, %v118
  %v147 = vpack.c.b16 %v121, %v120
  %v148 = vpack.c.b16 %v123, %v122
  %v149 = vpack.c.b16 %v125, %v124
  %v150 = vpack.c.b16 %v127, %v126
  %v151 = vpack.c.b16 %v129, %v128
  %v152 = vpack.c.b16 %v131, %v130
  %v153 = vpack.c.b16 %v133, %v132
  %v154 = vpack.c.b16 %v135, %v134
  %v155 = vpack.c.b16 %v137, %v136
  %v156 = vpack.c.b16 %v139, %v138
  %v157 = vpack.c.b16 %v141, %v140
  %v190 = vunpack.c.l.b16 %v55
  %v191 = vunpack.c.l.b16 %v56
  %v192 = vunpack.c.l.b16 %v57
  %v193 = vunpack.c.l.b16 %v58
  %v194 = vunpack.c.l.b16 %v59
  %v195 = vunpack.c.l.b16 %v60
  %v196 = vunpack.c.l.b16 %v61
  %v197 = vunpack.c.l.b16 %v62
  %v198 = vunpack.c.l.b16 %v63
  %v199 = vunpack.c.l.b16 %v64
  %v200 = vunpack.c.l.b16 %v65
  %v201 = vunpack.c.l.b16 %v66
  %v202 = vunpack.c.l.b16 %v67
  %v203 = vunpack.c.l.b16 %v68
  %v204 = vunpack.c.l.b16 %v69
  %v205 = vunpack.c.l.b16 %v70
  %v206 = vpack.c.b16 %v191, %v190
  %v207 = vpack.c.b16 %v193, %v192
  %v208 = vpack.c.b16 %v195, %v194
  %v209 = vpack.c.b16 %v197, %v196
  %v210 = vpack.c.b16 %v199, %v198
  %v211 = vpack.c.b16 %v201, %v200
  %v212 = vpack.c.b16 %v203, %v202
  %v213 = vpack.c.b16 %v205, %v204
  %222 = vmatprep.subr.bf16.mxu0 0
  %223 = vmatpush1.bf16.msra.mxu0 %v206
  %224 = vmatprep.subr.bf16.mxu0 0
  %225 = vmatpush1.bf16.msra.mxu0 %v207
  %226 = vmatprep.subr.bf16.mxu0 0
  %227 = vmatpush1.bf16.msra.mxu0 %v208
  %228 = vmatprep.subr.bf16.mxu0 0
  %229 = vmatpush1.bf16.msra.mxu0 %v209
  %230 = vmatprep.subr.bf16.mxu0 0
  %231 = vmatpush1.bf16.msra.mxu0 %v210
  %232 = vmatprep.subr.bf16.mxu0 0
  %233 = vmatpush1.bf16.msra.mxu0 %v211
  %234 = vmatprep.subr.bf16.mxu0 0
  %235 = vmatpush1.bf16.msra.mxu0 %v212
  %236 = vmatprep.subr.bf16.mxu0 0
  %237 = vmatpush1.bf16.msra.mxu0 %v213
  %238 = vmatprep.subr.bf16.mxu0 0
  %239 = vmatpush1.bf16.msra.mxu0 0
  %240 = vmatprep.subr.bf16.mxu0 0
  %241 = vmatpush1.bf16.msra.mxu0 0
  %242 = vmatprep.subr.bf16.mxu0 0
  %243 = vmatpush1.bf16.msra.mxu0 0
  %244 = vmatprep.subr.bf16.mxu0 0
  %245 = vmatpush1.bf16.msra.mxu0 0
  %246 = vmatprep.subr.bf16.mxu0 0
  %247 = vmatpush1.bf16.msra.mxu0 0
  %248 = vmatprep.subr.bf16.mxu0 0
  %249 = vmatpush1.bf16.msra.mxu0 0
  %250 = vmatprep.subr.bf16.mxu0 0
  %251 = vmatpush1.bf16.msra.mxu0 0
  %252 = vmatprep.subr.bf16.mxu0 0
  %253 = vmatpush1.bf16.msra.mxu0 0
  %254 = vmatprep.mubr.bf16.mxu0 0
  %255 = vmatmul.mubr.bf16.gmra.mrb[0].mxu0 %v142
  %v256 = vpop.f32.mrb[0].mxu0
  %v257 = vadd.f32 %v76, %v256
  %v258 = vpop.f32.mrb[0].mxu0
  %v259 = vpop.f32.mrb[0].mxu0
  %v260 = vadd.f32 %v76, %v259
  %v261 = vpop.f32.mrb[0].mxu0
  %262 = vmatprep.mubr.bf16.mxu0 0
  %263 = vmatmul.mubr.bf16.gmra.mrb[0].mxu0 %v143
  %v264 = vpop.f32.mrb[0].mxu0
  %v265 = vadd.f32 %v76, %v264
  %v266 = vpop.f32.mrb[0].mxu0
  %v267 = vpop.f32.mrb[0].mxu0
  %v268 = vadd.f32 %v76, %v267
  %v269 = vpop.f32.mrb[0].mxu0
  %270 = vmatprep.mubr.bf16.mxu0 0
  %271 = vmatmul.mubr.bf16.gmra.mrb[0].mxu0 %v144
  %v272 = vpop.f32.mrb[0].mxu0
  %v273 = vadd.f32 %v76, %v272
  %v274 = vpop.f32.mrb[0].mxu0
  %v275 = vpop.f32.mrb[0].mxu0
  %v276 = vadd.f32 %v76, %v275
  %v277 = vpop.f32.mrb[0].mxu0
  %278 = vmatprep.mubr.bf16.mxu0 0
  %279 = vmatmul.mubr.bf16.gmra.mrb[0].mxu0 %v145
  %v280 = vpop.f32.mrb[0].mxu0
  %v281 = vadd.f32 %v76, %v280
  %v282 = vpop.f32.mrb[0].mxu0
  %v283 = vpop.f32.mrb[0].mxu0
  %v284 = vadd.f32 %v76, %v283
  %v285 = vpop.f32.mrb[0].mxu0
  %286 = vmatprep.mubr.bf16.mxu0 0
  %287 = vmatmul.mubr.bf16.gmra.mrb[0].mxu0 %v146
  %v288 = vpop.f32.mrb[0].mxu0
  %v289 = vadd.f32 %v76, %v288
  %v290 = vpop.f32.mrb[0].mxu0
  %v291 = vpop.f32.mrb[0].mxu0
  %v292 = vadd.f32 %v76, %v291
  %v293 = vpop.f32.mrb[0].mxu0
  %294 = vmatprep.mubr.bf16.mxu0 0
  %295 = vmatmul.mubr.bf16.gmra.mrb[0].mxu0 %v147
  %v296 = vpop.f32.mrb[0].mxu0
  %v297 = vadd.f32 %v76, %v296
  %v298 = vpop.f32.mrb[0].mxu0
  %v299 = vpop.f32.mrb[0].mxu0
  %v300 = vadd.f32 %v76, %v299
  %v301 = vpop.f32.mrb[0].mxu0
  %302 = vmatprep.mubr.bf16.mxu0 0
  %303 = vmatmul.mubr.bf16.gmra.mrb[0].mxu0 %v148
  %v304 = vpop.f32.mrb[0].mxu0
  %v305 = vadd.f32 %v76, %v304
  %v306 = vpop.f32.mrb[0].mxu0
  %v307 = vpop.f32.mrb[0].mxu0
  %v308 = vadd.f32 %v76, %v307
  %v309 = vpop.f32.mrb[0].mxu0
  %310 = vmatprep.mubr.bf16.mxu0 0
  %311 = vmatmul.mubr.bf16.gmra.mrb[0].mxu0 %v149
  %v312 = vpop.f32.mrb[0].mxu0
  %v313 = vadd.f32 %v76, %v312
  %v314 = vpop.f32.mrb[0].mxu0
  %v315 = vpop.f32.mrb[0].mxu0
  %v316 = vadd.f32 %v76, %v315
  %v317 = vpop.f32.mrb[0].mxu0
  %318 = vmatprep.mubr.bf16.mxu0 0
  %319 = vmatmul.mubr.bf16.gmra.mrb[0].mxu0 %v150
  %v320 = vpop.f32.mrb[0].mxu0
  %v321 = vadd.f32 %v76, %v320
  %v322 = vpop.f32.mrb[0].mxu0
  %v323 = vpop.f32.mrb[0].mxu0
  %v324 = vadd.f32 %v76, %v323
  %v325 = vpop.f32.mrb[0].mxu0
  %326 = vmatprep.mubr.bf16.mxu0 0
  %327 = vmatmul.mubr.bf16.gmra.mrb[0].mxu0 %v151
  %v328 = vpop.f32.mrb[0].mxu0
  %v329 = vadd.f32 %v76, %v328
  %v330 = vpop.f32.mrb[0].mxu0
  %v331 = vpop.f32.mrb[0].mxu0
  %v332 = vadd.f32 %v76, %v331
  %v333 = vpop.f32.mrb[0].mxu0
  %334 = vmatprep.mubr.bf16.mxu0 0
  %335 = vmatmul.mubr.bf16.gmra.mrb[0].mxu0 %v152
  %v336 = vpop.f32.mrb[0].mxu0
  %v337 = vadd.f32 %v76, %v336
  %v338 = vpop.f32.mrb[0].mxu0
  %v339 = vpop.f32.mrb[0].mxu0
  %v340 = vadd.f32 %v76, %v339
  %v341 = vpop.f32.mrb[0].mxu0
  %342 = vmatprep.mubr.bf16.mxu0 0
  %343 = vmatmul.mubr.bf16.gmra.mrb[0].mxu0 %v153
  %v344 = vpop.f32.mrb[0].mxu0
  %v345 = vadd.f32 %v76, %v344
  %v346 = vpop.f32.mrb[0].mxu0
  %v347 = vpop.f32.mrb[0].mxu0
  %v348 = vadd.f32 %v76, %v347
  %v349 = vpop.f32.mrb[0].mxu0
  %350 = vmatprep.mubr.bf16.mxu0 0
  %351 = vmatmul.mubr.bf16.gmra.mrb[0].mxu0 %v154
  %v352 = vpop.f32.mrb[0].mxu0
  %v353 = vadd.f32 %v76, %v352
  %v354 = vpop.f32.mrb[0].mxu0
  %v355 = vpop.f32.mrb[0].mxu0
  %v356 = vadd.f32 %v76, %v355
  %v357 = vpop.f32.mrb[0].mxu0
  %358 = vmatprep.mubr.bf16.mxu0 0
  %359 = vmatmul.mubr.bf16.gmra.mrb[0].mxu0 %v155
  %v360 = vpop.f32.mrb[0].mxu0
  %v361 = vadd.f32 %v76, %v360
  %v362 = vpop.f32.mrb[0].mxu0
  %v363 = vpop.f32.mrb[0].mxu0
  %v364 = vadd.f32 %v76, %v363
  %v365 = vpop.f32.mrb[0].mxu0
  %366 = vmatprep.mubr.bf16.mxu0 0
  %367 = vmatmul.mubr.bf16.gmra.mrb[0].mxu0 %v156
  %v368 = vpop.f32.mrb[0].mxu0
  %v369 = vadd.f32 %v76, %v368
  %v370 = vpop.f32.mrb[0].mxu0
  %v371 = vpop.f32.mrb[0].mxu0
  %v372 = vadd.f32 %v76, %v371
  %v373 = vpop.f32.mrb[0].mxu0
  %374 = vmatprep.mubr.bf16.mxu0 0
  %375 = vmatmul.mubr.bf16.gmra.mrb[0].mxu0 %v157
  %v376 = vpop.f32.mrb[0].mxu0
  %v377 = vadd.f32 %v76, %v376
  %v378 = vpop.f32.mrb[0].mxu0
  %v379 = vpop.f32.mrb[0].mxu0
  %v380 = vadd.f32 %v76, %v379
  %v381 = vpop.f32.mrb[0].mxu0
  %382 = vdwg.mxu0
  %v383 = vmax.f32 %v257, 0.0
  %v384 = vmax.f32 %v260, 0.0
  %v385 = vmax.f32 %v265, 0.0
  %v386 = vmax.f32 %v268, 0.0
  %v387 = vmax.f32 %v273, 0.0
  %v388 = vmax.f32 %v276, 0.0
  %v389 = vmax.f32 %v281, 0.0
  %v390 = vmax.f32 %v284, 0.0
  %v391 = vmax.f32 %v289, 0.0
  %v392 = vmax.f32 %v292, 0.0
  %v393 = vmax.f32 %v297, 0.0
  %v394 = vmax.f32 %v300, 0.0
  %v395 = vmax.f32 %v305, 0.0
  %v396 = vmax.f32 %v308, 0.0
  %v397 = vmax.f32 %v313, 0.0
  %v398 = vmax.f32 %v316, 0.0
  %v399 = vmax.f32 %v321, 0.0
  %v400 = vmax.f32 %v324, 0.0
  %v401 = vmax.f32 %v329, 0.0
  %v402 = vmax.f32 %v332, 0.0
  %v403 = vmax.f32 %v337, 0.0
  %v404 = vmax.f32 %v340, 0.0
  %v405 = vmax.f32 %v345, 0.0
  %v406 = vmax.f32 %v348, 0.0
  %v407 = vmax.f32 %v353, 0.0
  %v408 = vmax.f32 %v356, 0.0
  %v409 = vmax.f32 %v361, 0.0
  %v410 = vmax.f32 %v364, 0.0
  %v411 = vmax.f32 %v369, 0.0
  %v412 = vmax.f32 %v372, 0.0
  %v413 = vmax.f32 %v377, 0.0
  %v414 = vmax.f32 %v380, 0.0
  %v415 = vpack.c.bf16 %v384, %v383
  %v416 = vpack.c.bf16 %v386, %v385
  %v417 = vpack.c.bf16 %v388, %v387
  %v418 = vpack.c.bf16 %v390, %v389
  %v419 = vpack.c.bf16 %v392, %v391
  %v420 = vpack.c.bf16 %v394, %v393
  %v421 = vpack.c.bf16 %v396, %v395
  %v422 = vpack.c.bf16 %v398, %v397
  %v423 = vpack.c.bf16 %v400, %v399
  %v424 = vpack.c.bf16 %v402, %v401
  %v425 = vpack.c.bf16 %v404, %v403
  %v426 = vpack.c.bf16 %v406, %v405
  %v427 = vpack.c.bf16 %v408, %v407
  %v428 = vpack.c.bf16 %v410, %v409
  %v429 = vpack.c.bf16 %v412, %v411
  %v430 = vpack.c.bf16 %v414, %v413
  %v431 = vld [vmem:[%s3] sm:$0xf]
  %v432 = vld [vmem:[%s3 + $0x4] sm:$0xf]
  %v433 = vld [vmem:[%s3 + $0x8] sm:$0xf]
  %v434 = vld [vmem:[%s3 + $0xc] sm:$0xf]
  %v435 = vld [vmem:[%s3 + $0x10] sm:$0xf]
  %v436 = vld [vmem:[%s3 + $0x14] sm:$0xf]
  %v437 = vld [vmem:[%s3 + $0x18] sm:$0xf]
  %v438 = vld [vmem:[%s3 + $0x1c] sm:$0xf]
  %v439 = vld [vmem:[%s3 + $0x20] sm:$0xf]
  %v440 = vld [vmem:[%s3 + $0x24] sm:$0xf]
  %v441 = vld [vmem:[%s3 + $0x28] sm:$0xf]
  %v442 = vld [vmem:[%s3 + $0x2c] sm:$0xf]
  %v443 = vld [vmem:[%s3 + $0x30] sm:$0xf]
  %v444 = vld [vmem:[%s3 + $0x34] sm:$0xf]
  %v445 = vld [vmem:[%s3 + $0x38] sm:$0xf]
  %v446 = vld [vmem:[%s3 + $0x3c] sm:$0xf]
  %v447 = vld [vmem:[#allocation2] sm:$0x1]
  %v449 = vlaneseq
  %v450 = vshrl.u32 %v449, 7
  %v451 = vsub.s32 0, %v450
  %v452 = vrot.slane %v447, %v451
  %v470 = vunpack.c.l.b16 %v431
  %v471 = vunpack.c.l.b16 %v432
  %v472 = vunpack.c.l.b16 %v433
  %v473 = vunpack.c.l.b16 %v434
  %v474 = vunpack.c.l.b16 %v435
  %v475 = vunpack.c.l.b16 %v436
  %v476 = vunpack.c.l.b16 %v437
  %v477 = vunpack.c.l.b16 %v438
  %v478 = vunpack.c.l.b16 %v439
  %v479 = vunpack.c.l.b16 %v440
  %v480 = vunpack.c.l.b16 %v441
  %v481 = vunpack.c.l.b16 %v442
  %v482 = vunpack.c.l.b16 %v443
  %v483 = vunpack.c.l.b16 %v444
  %v484 = vunpack.c.l.b16 %v445
  %v485 = vunpack.c.l.b16 %v446
  %v486 = vpack.c.b16 %v471, %v470
  %v487 = vpack.c.b16 %v473, %v472
  %v488 = vpack.c.b16 %v475, %v474
  %v489 = vpack.c.b16 %v477, %v476
  %v490 = vpack.c.b16 %v479, %v478
  %v491 = vpack.c.b16 %v481, %v480
  %v492 = vpack.c.b16 %v483, %v482
  %v493 = vpack.c.b16 %v485, %v484
  %502 = vmatprep.subr.bf16.mxu0 0
  %503 = vmatpush1.bf16.msra.mxu0 %v486
  %504 = vmatprep.subr.bf16.mxu0 0
  %505 = vmatpush1.bf16.msra.mxu0 %v487
  %506 = vmatprep.subr.bf16.mxu0 0
  %507 = vmatpush1.bf16.msra.mxu0 %v488
  %508 = vmatprep.subr.bf16.mxu0 0
  %509 = vmatpush1.bf16.msra.mxu0 %v489
  %510 = vmatprep.subr.bf16.mxu0 0
  %511 = vmatpush1.bf16.msra.mxu0 %v490
  %512 = vmatprep.subr.bf16.mxu0 0
  %513 = vmatpush1.bf16.msra.mxu0 %v491
  %514 = vmatprep.subr.bf16.mxu0 0
  %515 = vmatpush1.bf16.msra.mxu0 %v492
  %516 = vmatprep.subr.bf16.mxu0 0
  %517 = vmatpush1.bf16.msra.mxu0 %v493
  %518 = vmatprep.subr.bf16.mxu0 0
  %519 = vmatpush1.bf16.msra.mxu0 0
  %520 = vmatprep.subr.bf16.mxu0 0
  %521 = vmatpush1.bf16.msra.mxu0 0
  %522 = vmatprep.subr.bf16.mxu0 0
  %523 = vmatpush1.bf16.msra.mxu0 0
  %524 = vmatprep.subr.bf16.mxu0 0
  %525 = vmatpush1.bf16.msra.mxu0 0
  %526 = vmatprep.subr.bf16.mxu0 0
  %527 = vmatpush1.bf16.msra.mxu0 0
  %528 = vmatprep.subr.bf16.mxu0 0
  %529 = vmatpush1.bf16.msra.mxu0 0
  %530 = vmatprep.subr.bf16.mxu0 0
  %531 = vmatpush1.bf16.msra.mxu0 0
  %532 = vmatprep.subr.bf16.mxu0 0
  %533 = vmatpush1.bf16.msra.mxu0 0
  %534 = vmatprep.mubr.bf16.mxu0 0
  %535 = vmatmul.mubr.bf16.gmra.mrb[0].mxu0 %v415
  %v536 = vpop.f32.mrb[0].mxu0
  %v537 = vadd.f32 %v452, %v536
  %v538 = vpop.f32.mrb[0].mxu0
  %v539 = vpop.f32.mrb[0].mxu0
  %v540 = vadd.f32 %v452, %v539
  %v541 = vpop.f32.mrb[0].mxu0
  %542 = vmatprep.mubr.bf16.mxu0 0
  %543 = vmatmul.mubr.bf16.gmra.mrb[0].mxu0 %v416
  %v544 = vpop.f32.mrb[0].mxu0
  %v545 = vadd.f32 %v452, %v544
  %v546 = vpop.f32.mrb[0].mxu0
  %v547 = vpop.f32.mrb[0].mxu0
  %v548 = vadd.f32 %v452, %v547
  %v549 = vpop.f32.mrb[0].mxu0
  %550 = vmatprep.mubr.bf16.mxu0 0
  %551 = vmatmul.mubr.bf16.gmra.mrb[0].mxu0 %v417
  %v552 = vpop.f32.mrb[0].mxu0
  %v553 = vadd.f32 %v452, %v552
  %v554 = vpop.f32.mrb[0].mxu0
  %v555 = vpop.f32.mrb[0].mxu0
  %v556 = vadd.f32 %v452, %v555
  %v557 = vpop.f32.mrb[0].mxu0
  %558 = vmatprep.mubr.bf16.mxu0 0
  %559 = vmatmul.mubr.bf16.gmra.mrb[0].mxu0 %v418
  %v560 = vpop.f32.mrb[0].mxu0
  %v561 = vadd.f32 %v452, %v560
  %v562 = vpop.f32.mrb[0].mxu0
  %v563 = vpop.f32.mrb[0].mxu0
  %v564 = vadd.f32 %v452, %v563
  %v565 = vpop.f32.mrb[0].mxu0
  %566 = vmatprep.mubr.bf16.mxu0 0
  %567 = vmatmul.mubr.bf16.gmra.mrb[0].mxu0 %v419
  %v568 = vpop.f32.mrb[0].mxu0
  %v569 = vadd.f32 %v452, %v568
  %v570 = vpop.f32.mrb[0].mxu0
  %v571 = vpop.f32.mrb[0].mxu0
  %v572 = vadd.f32 %v452, %v571
  %v573 = vpop.f32.mrb[0].mxu0
  %574 = vmatprep.mubr.bf16.mxu0 0
  %575 = vmatmul.mubr.bf16.gmra.mrb[0].mxu0 %v420
  %v576 = vpop.f32.mrb[0].mxu0
  %v577 = vadd.f32 %v452, %v576
  %v578 = vpop.f32.mrb[0].mxu0
  %v579 = vpop.f32.mrb[0].mxu0
  %v580 = vadd.f32 %v452, %v579
  %v581 = vpop.f32.mrb[0].mxu0
  %582 = vmatprep.mubr.bf16.mxu0 0
  %583 = vmatmul.mubr.bf16.gmra.mrb[0].mxu0 %v421
  %v584 = vpop.f32.mrb[0].mxu0
  %v585 = vadd.f32 %v452, %v584
  %v586 = vpop.f32.mrb[0].mxu0
  %v587 = vpop.f32.mrb[0].mxu0
  %v588 = vadd.f32 %v452, %v587
  %v589 = vpop.f32.mrb[0].mxu0
  %590 = vmatprep.mubr.bf16.mxu0 0
  %591 = vmatmul.mubr.bf16.gmra.mrb[0].mxu0 %v422
  %v592 = vpop.f32.mrb[0].mxu0
  %v593 = vadd.f32 %v452, %v592
  %v594 = vpop.f32.mrb[0].mxu0
  %v595 = vpop.f32.mrb[0].mxu0
  %v596 = vadd.f32 %v452, %v595
  %v597 = vpop.f32.mrb[0].mxu0
  %598 = vmatprep.mubr.bf16.mxu0 0
  %599 = vmatmul.mubr.bf16.gmra.mrb[0].mxu0 %v423
  %v600 = vpop.f32.mrb[0].mxu0
  %v601 = vadd.f32 %v452, %v600
  %v602 = vpop.f32.mrb[0].mxu0
  %v603 = vpop.f32.mrb[0].mxu0
  %v604 = vadd.f32 %v452, %v603
  %v605 = vpop.f32.mrb[0].mxu0
  %606 = vmatprep.mubr.bf16.mxu0 0
  %607 = vmatmul.mubr.bf16.gmra.mrb[0].mxu0 %v424
  %v608 = vpop.f32.mrb[0].mxu0
  %v609 = vadd.f32 %v452, %v608
  %v610 = vpop.f32.mrb[0].mxu0
  %v611 = vpop.f32.mrb[0].mxu0
  %v612 = vadd.f32 %v452, %v611
  %v613 = vpop.f32.mrb[0].mxu0
  %614 = vmatprep.mubr.bf16.mxu0 0
  %615 = vmatmul.mubr.bf16.gmra.mrb[0].mxu0 %v425
  %v616 = vpop.f32.mrb[0].mxu0
  %v617 = vadd.f32 %v452, %v616
  %v618 = vpop.f32.mrb[0].mxu0
  %v619 = vpop.f32.mrb[0].mxu0
  %v620 = vadd.f32 %v452, %v619
  %v621 = vpop.f32.mrb[0].mxu0
  %622 = vmatprep.mubr.bf16.mxu0 0
  %623 = vmatmul.mubr.bf16.gmra.mrb[0].mxu0 %v426
  %v624 = vpop.f32.mrb[0].mxu0
  %v625 = vadd.f32 %v452, %v624
  %v626 = vpop.f32.mrb[0].mxu0
  %v627 = vpop.f32.mrb[0].mxu0
  %v628 = vadd.f32 %v452, %v627
  %v629 = vpop.f32.mrb[0].mxu0
  %630 = vmatprep.mubr.bf16.mxu0 0
  %631 = vmatmul.mubr.bf16.gmra.mrb[0].mxu0 %v427
  %v632 = vpop.f32.mrb[0].mxu0
  %v633 = vadd.f32 %v452, %v632
  %v634 = vpop.f32.mrb[0].mxu0
  %v635 = vpop.f32.mrb[0].mxu0
  %v636 = vadd.f32 %v452, %v635
  %v637 = vpop.f32.mrb[0].mxu0
  %638 = vmatprep.mubr.bf16.mxu0 0
  %639 = vmatmul.mubr.bf16.gmra.mrb[0].mxu0 %v428
  %v640 = vpop.f32.mrb[0].mxu0
  %v641 = vadd.f32 %v452, %v640
  %v642 = vpop.f32.mrb[0].mxu0
  %v643 = vpop.f32.mrb[0].mxu0
  %v644 = vadd.f32 %v452, %v643
  %v645 = vpop.f32.mrb[0].mxu0
  %646 = vmatprep.mubr.bf16.mxu0 0
  %647 = vmatmul.mubr.bf16.gmra.mrb[0].mxu0 %v429
  %v648 = vpop.f32.mrb[0].mxu0
  %v649 = vadd.f32 %v452, %v648
  %v650 = vpop.f32.mrb[0].mxu0
  %v651 = vpop.f32.mrb[0].mxu0
  %v652 = vadd.f32 %v452, %v651
  %v653 = vpop.f32.mrb[0].mxu0
  %654 = vmatprep.mubr.bf16.mxu0 0
  %655 = vmatmul.mubr.bf16.gmra.mrb[0].mxu0 %v430
  %v656 = vpop.f32.mrb[0].mxu0
  %v657 = vadd.f32 %v452, %v656
  %v658 = vpop.f32.mrb[0].mxu0
  %v659 = vpop.f32.mrb[0].mxu0
  %v660 = vadd.f32 %v452, %v659
  %v661 = vpop.f32.mrb[0].mxu0
  %662 = vdwg.mxu0
  %v663 = vxor.u32 %v537, 2147483648
  %v664 = vxor.u32 %v540, 2147483648
  %v665 = vxor.u32 %v545, 2147483648
  %v666 = vxor.u32 %v548, 2147483648
  %v667 = vxor.u32 %v553, 2147483648
  %v668 = vxor.u32 %v556, 2147483648
  %v669 = vxor.u32 %v561, 2147483648
  %v670 = vxor.u32 %v564, 2147483648
  %v671 = vxor.u32 %v569, 2147483648
  %v672 = vxor.u32 %v572, 2147483648
  %v673 = vxor.u32 %v577, 2147483648
  %v674 = vxor.u32 %v580, 2147483648
  %v675 = vxor.u32 %v585, 2147483648
  %v676 = vxor.u32 %v588, 2147483648
  %v677 = vxor.u32 %v593, 2147483648
  %v678 = vxor.u32 %v596, 2147483648
  %v679 = vxor.u32 %v601, 2147483648
  %v680 = vxor.u32 %v604, 2147483648
  %v681 = vxor.u32 %v609, 2147483648
  %v682 = vxor.u32 %v612, 2147483648
  %v683 = vxor.u32 %v617, 2147483648
  %v684 = vxor.u32 %v620, 2147483648
  %v685 = vxor.u32 %v625, 2147483648
  %v686 = vxor.u32 %v628, 2147483648
  %v687 = vxor.u32 %v633, 2147483648
  %v688 = vxor.u32 %v636, 2147483648
  %v689 = vxor.u32 %v641, 2147483648
  %v690 = vxor.u32 %v644, 2147483648
  %v691 = vxor.u32 %v649, 2147483648
  %v692 = vxor.u32 %v652, 2147483648
  %v693 = vxor.u32 %v657, 2147483648
  %v694 = vxor.u32 %v660, 2147483648
  %v695 = vmul.f32 %v663, 1.442695
  %v696 = vpow.pop %v695
  %v697 = vmul.f32 %v664, 1.442695
  %v698 = vpow.pop %v697
  %v699 = vmul.f32 %v665, 1.442695
  %v700 = vpow.pop %v699
  %v701 = vmul.f32 %v666, 1.442695
  %v702 = vpow.pop %v701
  %v703 = vmul.f32 %v667, 1.442695
  %v704 = vpow.pop %v703
  %v705 = vmul.f32 %v668, 1.442695
  %v706 = vpow.pop %v705
  %v707 = vmul.f32 %v669, 1.442695
  %v708 = vpow.pop %v707
  %v709 = vmul.f32 %v670, 1.442695
  %v710 = vpow.pop %v709
  %v711 = vmul.f32 %v671, 1.442695
  %v712 = vpow.pop %v711
  %v713 = vmul.f32 %v672, 1.442695
  %v714 = vpow.pop %v713
  %v715 = vmul.f32 %v673, 1.442695
  %v716 = vpow.pop %v715
  %v717 = vmul.f32 %v674, 1.442695
  %v718 = vpow.pop %v717
  %v719 = vmul.f32 %v675, 1.442695
  %v720 = vpow.pop %v719
  %v721 = vmul.f32 %v676, 1.442695
  %v722 = vpow.pop %v721
  %v723 = vmul.f32 %v677, 1.442695
  %v724 = vpow.pop %v723
  %v725 = vmul.f32 %v678, 1.442695
  %v726 = vpow.pop %v725
  %v727 = vmul.f32 %v679, 1.442695
  %v728 = vpow.pop %v727
  %v729 = vmul.f32 %v680, 1.442695
  %v730 = vpow.pop %v729
  %v731 = vmul.f32 %v681, 1.442695
  %v732 = vpow.pop %v731
  %v733 = vmul.f32 %v682, 1.442695
  %v734 = vpow.pop %v733
  %v735 = vmul.f32 %v683, 1.442695
  %v736 = vpow.pop %v735
  %v737 = vmul.f32 %v684, 1.442695
  %v738 = vpow.pop %v737
  %v739 = vmul.f32 %v685, 1.442695
  %v740 = vpow.pop %v739
  %v741 = vmul.f32 %v686, 1.442695
  %v742 = vpow.pop %v741
  %v743 = vmul.f32 %v687, 1.442695
  %v744 = vpow.pop %v743
  %v745 = vmul.f32 %v688, 1.442695
  %v746 = vpow.pop %v745
  %v747 = vmul.f32 %v689, 1.442695
  %v748 = vpow.pop %v747
  %v749 = vmul.f32 %v690, 1.442695
  %v750 = vpow.pop %v749
  %v751 = vmul.f32 %v691, 1.442695
  %v752 = vpow.pop %v751
  %v753 = vmul.f32 %v692, 1.442695
  %v754 = vpow.pop %v753
  %v755 = vmul.f32 %v693, 1.442695
  %v756 = vpow.pop %v755
  %v757 = vmul.f32 %v694, 1.442695
  %v758 = vpow.pop %v757
  %v759 = vadd.f32 %v696, 1.0
  %v760 = vadd.f32 %v698, 1.0
  %v761 = vadd.f32 %v700, 1.0
  %v762 = vadd.f32 %v702, 1.0
  %v763 = vadd.f32 %v704, 1.0
  %v764 = vadd.f32 %v706, 1.0
  %v765 = vadd.f32 %v708, 1.0
  %v766 = vadd.f32 %v710, 1.0
  %v767 = vadd.f32 %v712, 1.0
  %v768 = vadd.f32 %v714, 1.0
  %v769 = vadd.f32 %v716, 1.0
  %v770 = vadd.f32 %v718, 1.0
  %v771 = vadd.f32 %v720, 1.0
  %v772 = vadd.f32 %v722, 1.0
  %v773 = vadd.f32 %v724, 1.0
  %v774 = vadd.f32 %v726, 1.0
  %v775 = vadd.f32 %v728, 1.0
  %v776 = vadd.f32 %v730, 1.0
  %v777 = vadd.f32 %v732, 1.0
  %v778 = vadd.f32 %v734, 1.0
  %v779 = vadd.f32 %v736, 1.0
  %v780 = vadd.f32 %v738, 1.0
  %v781 = vadd.f32 %v740, 1.0
  %v782 = vadd.f32 %v742, 1.0
  %v783 = vadd.f32 %v744, 1.0
  %v784 = vadd.f32 %v746, 1.0
  %v785 = vadd.f32 %v748, 1.0
  %v786 = vadd.f32 %v750, 1.0
  %v787 = vadd.f32 %v752, 1.0
  %v788 = vadd.f32 %v754, 1.0
  %v789 = vadd.f32 %v756, 1.0
  %v790 = vadd.f32 %v758, 1.0
  %v791 = vrcp.pop %v759
  %v792 = vmul.f32 1.0, %v791
  %v793 = vrcp.pop %v760
  %v794 = vmul.f32 1.0, %v793
  %v795 = vrcp.pop %v761
  %v796 = vmul.f32 1.0, %v795
  %v797 = vrcp.pop %v762
  %v798 = vmul.f32 1.0, %v797
  %v799 = vrcp.pop %v763
  %v800 = vmul.f32 1.0, %v799
  %v801 = vrcp.pop %v764
  %v802 = vmul.f32 1.0, %v801
  %v803 = vrcp.pop %v765
  %v804 = vmul.f32 1.0, %v803
  %v805 = vrcp.pop %v766
  %v806 = vmul.f32 1.0, %v805
  %v807 = vrcp.pop %v767
  %v808 = vmul.f32 1.0, %v807
  %v809 = vrcp.pop %v768
  %v810 = vmul.f32 1.0, %v809
  %v811 = vrcp.pop %v769
  %v812 = vmul.f32 1.0, %v811
  %v813 = vrcp.pop %v770
  %v814 = vmul.f32 1.0, %v813
  %v815 = vrcp.pop %v771
  %v816 = vmul.f32 1.0, %v815
  %v817 = vrcp.pop %v772
  %v818 = vmul.f32 1.0, %v817
  %v819 = vrcp.pop %v773
  %v820 = vmul.f32 1.0, %v819
  %v821 = vrcp.pop %v774
  %v822 = vmul.f32 1.0, %v821
  %v823 = vrcp.pop %v775
  %v824 = vmul.f32 1.0, %v823
  %v825 = vrcp.pop %v776
  %v826 = vmul.f32 1.0, %v825
  %v827 = vrcp.pop %v777
  %v828 = vmul.f32 1.0, %v827
  %v829 = vrcp.pop %v778
  %v830 = vmul.f32 1.0, %v829
  %v831 = vrcp.pop %v779
  %v832 = vmul.f32 1.0, %v831
  %v833 = vrcp.pop %v780
  %v834 = vmul.f32 1.0, %v833
  %v835 = vrcp.pop %v781
  %v836 = vmul.f32 1.0, %v835
  %v837 = vrcp.pop %v782
  %v838 = vmul.f32 1.0, %v837
  %v839 = vrcp.pop %v783
  %v840 = vmul.f32 1.0, %v839
  %v841 = vrcp.pop %v784
  %v842 = vmul.f32 1.0, %v841
  %v843 = vrcp.pop %v785
  %v844 = vmul.f32 1.0, %v843
  %v845 = vrcp.pop %v786
  %v846 = vmul.f32 1.0, %v845
  %v847 = vrcp.pop %v787
  %v848 = vmul.f32 1.0, %v847
  %v849 = vrcp.pop %v788
  %v850 = vmul.f32 1.0, %v849
  %v851 = vrcp.pop %v789
  %v852 = vmul.f32 1.0, %v851
  %v853 = vrcp.pop %v790
  %v854 = vmul.f32 1.0, %v853
  %vm855 = vcmask 7168
  %856 = vst.msk [vmem:[%s5] sm:$0xff] %vm855, %v792
  %857 = vst.msk [vmem:[%s5 + $0x8] sm:$0xff] %vm855, %v794
  %858 = vst.msk [vmem:[%s5 + $0x10] sm:$0xff] %vm855, %v796
  %859 = vst.msk [vmem:[%s5 + $0x18] sm:$0xff] %vm855, %v798
  %860 = vst.msk [vmem:[%s5 + $0x20] sm:$0xff] %vm855, %v800
  %861 = vst.msk [vmem:[%s5 + $0x28] sm:$0xff] %vm855, %v802
  %862 = vst.msk [vmem:[%s5 + $0x30] sm:$0xff] %vm855, %v804
  %863 = vst.msk [vmem:[%s5 + $0x38] sm:$0xff] %vm855, %v806
  %864 = vst.msk [vmem:[%s5 + $0x40] sm:$0xff] %vm855, %v808
  %865 = vst.msk [vmem:[%s5 + $0x48] sm:$0xff] %vm855, %v810
  %866 = vst.msk [vmem:[%s5 + $0x50] sm:$0xff] %vm855, %v812
  %867 = vst.msk [vmem:[%s5 + $0x58] sm:$0xff] %vm855, %v814
  %868 = vst.msk [vmem:[%s5 + $0x60] sm:$0xff] %vm855, %v816
  %869 = vst.msk [vmem:[%s5 + $0x68] sm:$0xff] %vm855, %v818
  %870 = vst.msk [vmem:[%s5 + $0x70] sm:$0xff] %vm855, %v820
  %871 = vst.msk [vmem:[%s5 + $0x78] sm:$0xff] %vm855, %v822
  %872 = vst.msk [vmem:[%s5 + $0x80] sm:$0xff] %vm855, %v824
  %873 = vst.msk [vmem:[%s5 + $0x88] sm:$0xff] %vm855, %v826
  %874 = vst.msk [vmem:[%s5 + $0x90] sm:$0xff] %vm855, %v828
  %875 = vst.msk [vmem:[%s5 + $0x98] sm:$0xff] %vm855, %v830
  %876 = vst.msk [vmem:[%s5 + $0xa0] sm:$0xff] %vm855, %v832
  %877 = vst.msk [vmem:[%s5 + $0xa8] sm:$0xff] %vm855, %v834
  %878 = vst.msk [vmem:[%s5 + $0xb0] sm:$0xff] %vm855, %v836
  %879 = vst.msk [vmem:[%s5 + $0xb8] sm:$0xff] %vm855, %v838
  %880 = vst.msk [vmem:[%s5 + $0xc0] sm:$0xff] %vm855, %v840
  %881 = vst.msk [vmem:[%s5 + $0xc8] sm:$0xff] %vm855, %v842
  %882 = vst.msk [vmem:[%s5 + $0xd0] sm:$0xff] %vm855, %v844
  %883 = vst.msk [vmem:[%s5 + $0xd8] sm:$0xff] %vm855, %v846
  %884 = vst.msk [vmem:[%s5 + $0xe0] sm:$0xff] %vm855, %v848
  %885 = vst.msk [vmem:[%s5 + $0xe8] sm:$0xff] %vm855, %v850
  %886 = vst.msk [vmem:[%s5 + $0xf0] sm:$0xff] %vm855, %v852
  %887 = vst.msk [vmem:[%s5 + $0xf8] sm:$0xff] %vm855, %v854
  // Predicated region
  $region22: #{causal_rec_forward.1} parent=0 // pred_check
    _
  $region23: #{causal_rec_forward.1} parent=0 // pred_check_branch
    %889 = sbr.rel (0) target = $region25
  $region24: #{causal_rec_forward.1} parent=0 // pred_region
    _
  $region25: #{causal_rec_forward.1} parent=0 // pred_fallthru
    _
  // Predicated region
  $region26: #{causal_rec_forward.1} parent=0 // pred_check
    _
  $region27: #{causal_rec_forward.1} parent=0 // pred_check_branch
    %891 = sbr.rel (0) target = $region29
  $region28: #{causal_rec_forward.1} parent=0 // pred_region
    _
  $region29: #{causal_rec_forward.1} parent=0 // pred_fallthru
    _

</llo_original>
